<compile_context>
chip_gen: v5e
topology: v5e:2x2
jax: 0.10.0
libtpu: 0.0.40
codegen_flags: <defaults>
</compile_context>

<pallas_src>
import functools
import math

import jax
import jax.numpy as jnp
from jax.experimental import pallas as pl
from jax.experimental.pallas import tpu as pltpu

STATE_SIZE = 4     # CartPole-v1 observation dim
ACTION_SIZE = 2    # CartPole-v1 action dim
HIDDEN = 64        # logical hidden width (PyTorch module)

# Padded, lane-dense layout used by the kernel.
HPAD = 128                     # hidden padded to a full vreg lane width
IN_PAD = 8                     # input features padded 4 -> 8 (sublane multiple)
W2_OFF = IN_PAD                # rows [8, 136)   : W2 (128 x 128, zero-padded)
W3_OFF = IN_PAD + HPAD         # rows [136, 264) : W3 (128 x 128, zero-padded)
BIAS_OFF = IN_PAD + 2 * HPAD   # rows [264, 267) : b1, b2, b3 (one row each)
P_ROWS = BIAS_OFF + 8          # 272 rows total (multiple of 8)

TILE_B_MAX = 2048              # per-step batch tile (overhead amortization)


def qnet_kernel(x_ref, p_ref, o_ref, *, matmul_dtype):
    mdt = matmul_dtype
    x = x_ref[...].astype(mdt)                            # (TILE_B, IN_PAD)

    w1 = p_ref[0:IN_PAD, :].astype(mdt)                   # (8,   128)
    w2 = p_ref[W2_OFF:W2_OFF + HPAD, :].astype(mdt)       # (128, 128)
    w3 = p_ref[W3_OFF:W3_OFF + HPAD, :].astype(mdt)       # (128, 128)
    b1 = p_ref[BIAS_OFF + 0:BIAS_OFF + 1, :]              # (1, 128) f32
    b2 = p_ref[BIAS_OFF + 1:BIAS_OFF + 2, :]
    b3 = p_ref[BIAS_OFF + 2:BIAS_OFF + 3, :]

    # All three layers on the MXU, f32 accumulation.
    h1 = jnp.maximum(
        jnp.dot(x, w1, preferred_element_type=jnp.float32) + b1, 0.0)
    h2 = jnp.maximum(
        jnp.dot(h1.astype(mdt), w2, preferred_element_type=jnp.float32) + b2,
        0.0)
    out = jnp.dot(h2.astype(mdt), w3, preferred_element_type=jnp.float32) + b3

    # Narrow (ACTION_SIZE-wide) store: block last dim == full array last dim.
    o_ref[...] = out[:, :ACTION_SIZE].astype(o_ref.dtype)


def qnetwork_forward(x, packed_params, *, tile_b=None,
                     matmul_dtype=jnp.bfloat16):
    """x: [B, STATE_SIZE] f32, packed_params: [P_ROWS, HPAD] f32
       -> [B, ACTION_SIZE] f32."""
    B = x.shape[0]
    if tile_b is None:
        tile_b = B if B <= TILE_B_MAX else TILE_B_MAX
    grid = (pl.cdiv(B, tile_b),)

    # Zero-pad features 4 -> 8 so layer 1 is a clean K=8 MXU matmul.
    if x.shape[1] != IN_PAD:
        x = jnp.pad(x, ((0, 0), (0, IN_PAD - x.shape[1])))

    kernel = functools.partial(qnet_kernel, matmul_dtype=matmul_dtype)

    def call(single_buffer_params):
        if single_buffer_params:
            # Constant index_map -> never re-fetched; single buffer saves VMEM.
            p_spec = pl.BlockSpec((P_ROWS, HPAD), lambda i: (0, 0),
                                  pipeline_mode=pl.Buffered(1))
        else:
            p_spec = pl.BlockSpec((P_ROWS, HPAD), lambda i: (0, 0))
        return pl.pallas_call(
            kernel,
            out_shape=jax.ShapeDtypeStruct((B, ACTION_SIZE), jnp.float32),
            grid=grid,
            in_specs=[
                # Batch-tiled activations: pipelined HBM<->VMEM DMA per step.
                pl.BlockSpec((tile_b, IN_PAD), lambda i: (i, 0)),
                p_spec,
            ],
            out_specs=pl.BlockSpec((tile_b, ACTION_SIZE), lambda i: (i, 0)),
            compiler_params=pltpu.CompilerParams(
                dimension_semantics=("parallel",),
            ),
        )(x, packed_params)

    try:
        return call(True)
    except Exception:
        # Fallback: default double-buffered params if this jax/Mosaic version
        # rejects pipeline_mode=pl.Buffered(1). Purely a VMEM-hygiene delta.
        return call(False)


def init_params(key):
    """Deterministic init mimicking nn.Linear default (U[-1/sqrt(fan_in), +])."""
    ks = jax.random.split(key, 6)

    def linear(kw, kb, fan_in, fan_out):
        bound = 1.0 / math.sqrt(fan_in)
        w = jax.random.uniform(kw, (fan_in, fan_out), jnp.float32, -bound, bound)
        b = jax.random.uniform(kb, (fan_out,), jnp.float32, -bound, bound)
        return w, b

    w1, b1 = linear(ks[0], ks[1], STATE_SIZE, HIDDEN)
    w2, b2 = linear(ks[2], ks[3], HIDDEN, HIDDEN)
    w3, b3 = linear(ks[4], ks[5], HIDDEN, ACTION_SIZE)
    return (w1, b1, w2, b2, w3, b3)


def pack_params(params):
    """Pack the 6 logical tensors into one zero-padded (P_ROWS, HPAD) slab."""
    w1, b1, w2, b2, w3, b3 = params
    p = jnp.zeros((P_ROWS, HPAD), jnp.float32)
    p = p.at[0:STATE_SIZE, 0:HIDDEN].set(w1)                       # W1: 4 x 64
    p = p.at[W2_OFF:W2_OFF + HIDDEN, 0:HIDDEN].set(w2)             # W2: 64 x 64
    p = p.at[W3_OFF:W3_OFF + HIDDEN, 0:ACTION_SIZE].set(w3)        # W3: 64 x 2
    p = p.at[BIAS_OFF + 0, 0:HIDDEN].set(b1)
    p = p.at[BIAS_OFF + 1, 0:HIDDEN].set(b2)
    p = p.at[BIAS_OFF + 2, 0:ACTION_SIZE].set(b3)
    return p


def qnetwork_ref(x, params):
    w1, b1, w2, b2, w3, b3 = params
    h1 = jnp.maximum(x @ w1 + b1, 0.0)
    h2 = jnp.maximum(h1 @ w2 + b2, 0.0)
    return h2 @ w3 + b3


if __name__ == "__main__":
    key = jax.random.PRNGKey(0)
    pkey, xkey = jax.random.split(key)
    params = init_params(pkey)
    packed = pack_params(params)

    batch = 16
    x = jax.random.normal(xkey, (batch, STATE_SIZE), jnp.float32)
    ref = qnetwork_ref(x, params)

    # Default (bf16 MXU operands, f32 accumulation) -- loose tolerance vs f32.
    out_bf16 = jax.block_until_ready(qnetwork_forward(x, packed))
    assert out_bf16.shape == (batch, ACTION_SIZE)
    assert jnp.allclose(out_bf16, ref, atol=1e-1, rtol=1e-1)

    # Exact-f32 path -- tight tolerance against the reference.
    out_f32 = jax.block_until_ready(
        qnetwork_forward(x, packed, matmul_dtype=jnp.float32))
    assert jnp.allclose(out_f32, ref, atol=1e-4, rtol=1e-4)

    # Multi-step batch grid (tile_b=8 -> 2 grid iterations) to exercise the
    # pipelined / parallel path as well.
    out_tiled = jax.block_until_ready(
        qnetwork_forward(x, packed, tile_b=8, matmul_dtype=jnp.float32))
    assert jnp.allclose(out_tiled, ref, atol=1e-4, rtol=1e-4)

    print("KERNEL_OK")
</pallas_src>

<mosaic_0001>
module attributes {stable_mosaic.version = 11 : i64} {
  func.func @qnet_kernel(%arg0: i32, %arg1: memref<16x8xf32, #tpu.memory_space<vmem>>, %arg2: memref<272x128xf32, #tpu.memory_space<vmem>>, %arg3: memref<16x2xf32, #tpu.memory_space<vmem>>) attributes {dimension_semantics = [#tpu.dimension_semantics<parallel>], iteration_bounds = array<i64: 1>, scalar_prefetch = 0 : i64, scratch_operands = 0 : i64, tpu.core_type = #tpu.core_type<tc>, window_params = [{transform_indices = @transform_0, window_bounds = array<i64: 16, 8>}, {pipeline_mode = #tpu.pipeline_mode<synchronous>, transform_indices = @transform_1, window_bounds = array<i64: 272, 128>}, {transform_indices = @transform_2, window_bounds = array<i64: 16, 2>}]} {
    %c0 = arith.constant 0 : index
    %c0_0 = arith.constant 0 : index
    %0 = vector.load %arg1[%c0, %c0_0] : memref<16x8xf32, #tpu.memory_space<vmem>>, vector<16x8xf32>
    %1 = arith.truncf %0 : vector<16x8xf32> to vector<16x8xbf16>
    %c0_1 = arith.constant 0 : index
    %c0_2 = arith.constant 0 : index
    %2 = vector.load %arg2[%c0_1, %c0_2] : memref<272x128xf32, #tpu.memory_space<vmem>>, vector<8x128xf32>
    %3 = arith.truncf %2 : vector<8x128xf32> to vector<8x128xbf16>
    %c8 = arith.constant 8 : index
    %c0_3 = arith.constant 0 : index
    %4 = vector.load %arg2[%c8, %c0_3] : memref<272x128xf32, #tpu.memory_space<vmem>>, vector<128x128xf32>
    %5 = arith.truncf %4 : vector<128x128xf32> to vector<128x128xbf16>
    %c136 = arith.constant 136 : index
    %c0_4 = arith.constant 0 : index
    %6 = vector.load %arg2[%c136, %c0_4] : memref<272x128xf32, #tpu.memory_space<vmem>>, vector<128x128xf32>
    %7 = arith.truncf %6 : vector<128x128xf32> to vector<128x128xbf16>
    %c264 = arith.constant 264 : index
    %c0_5 = arith.constant 0 : index
    %8 = vector.load %arg2[%c264, %c0_5] : memref<272x128xf32, #tpu.memory_space<vmem>>, vector<1x128xf32>
    %c265 = arith.constant 265 : index
    %c0_6 = arith.constant 0 : index
    %9 = vector.load %arg2[%c265, %c0_6] : memref<272x128xf32, #tpu.memory_space<vmem>>, vector<1x128xf32>
    %c266 = arith.constant 266 : index
    %c0_7 = arith.constant 0 : index
    %10 = vector.load %arg2[%c266, %c0_7] : memref<272x128xf32, #tpu.memory_space<vmem>>, vector<1x128xf32>
    %cst = arith.constant dense<0.000000e+00> : vector<16x128xf32>
    %11 = tpu.matmul %1, %3, %cst {dimension_numbers = #tpu.dot_dimension_numbers<[1], [0], [0], [1], [0, 0, 1, 1], [], []>} : vector<16x8xbf16>, vector<8x128xbf16>, vector<16x128xf32> -> vector<16x128xf32>
    %12 = vector.broadcast %8 : vector<1x128xf32> to vector<16x128xf32>
    %13 = arith.addf %11, %12 : vector<16x128xf32>
    %cst_8 = arith.constant 0.000000e+00 : f32
    %14 = vector.broadcast %cst_8 : f32 to vector<16x128xf32>
    %15 = arith.maximumf %13, %14 : vector<16x128xf32>
    %16 = arith.truncf %15 : vector<16x128xf32> to vector<16x128xbf16>
    %cst_9 = arith.constant dense<0.000000e+00> : vector<16x128xf32>
    %17 = tpu.matmul %16, %5, %cst_9 {dimension_numbers = #tpu.dot_dimension_numbers<[1], [0], [0], [1], [0, 0, 1, 1], [], []>} : vector<16x128xbf16>, vector<128x128xbf16>, vector<16x128xf32> -> vector<16x128xf32>
    %18 = vector.broadcast %9 : vector<1x128xf32> to vector<16x128xf32>
    %19 = arith.addf %17, %18 : vector<16x128xf32>
    %cst_10 = arith.constant 0.000000e+00 : f32
    %20 = vector.broadcast %cst_10 : f32 to vector<16x128xf32>
    %21 = arith.maximumf %19, %20 : vector<16x128xf32>
    %22 = arith.truncf %21 : vector<16x128xf32> to vector<16x128xbf16>
    %cst_11 = arith.constant dense<0.000000e+00> : vector<16x128xf32>
    %23 = tpu.matmul %22, %7, %cst_11 {dimension_numbers = #tpu.dot_dimension_numbers<[1], [0], [0], [1], [0, 0, 1, 1], [], []>} : vector<16x128xbf16>, vector<128x128xbf16>, vector<16x128xf32> -> vector<16x128xf32>
    %24 = vector.broadcast %10 : vector<1x128xf32> to vector<16x128xf32>
    %25 = arith.addf %23, %24 : vector<16x128xf32>
    %26 = vector.extract_strided_slice %25 {offsets = [0, 0], sizes = [16, 2], strides = [1, 1]} : vector<16x128xf32> to vector<16x2xf32>
    %c0_12 = arith.constant 0 : index
    %c0_13 = arith.constant 0 : index
    %27 = vector.load %arg3[%c0_12, %c0_13] : memref<16x2xf32, #tpu.memory_space<vmem>>, vector<16x2xf32>
    tpu.vector_store %arg3[%c0_12, %c0_13], %26 {strides = array<i32>} : memref<16x2xf32, #tpu.memory_space<vmem>>, vector<16x2xf32>,
    return
  }
  func.func @transform_0(%arg0: i32) -> (i32, i32) {
    %c0_i32 = arith.constant 0 : i32
    %c0_i32_0 = arith.constant 0 : i32
    return %arg0, %c0_i32 : i32, i32
  }
  func.func @transform_1(%arg0: i32) -> (i32, i32) {
    %c0_i32 = arith.constant 0 : i32
    %c0_i32_0 = arith.constant 0 : i32
    %c0_i32_1 = arith.constant 0 : i32
    return %c0_i32, %c0_i32_0 : i32, i32
  }
  func.func @transform_2(%arg0: i32) -> (i32, i32) {
    %c0_i32 = arith.constant 0 : i32
    %c0_i32_0 = arith.constant 0 : i32
    return %arg0, %c0_i32 : i32, i32
  }
}

module attributes {stable_mosaic.version = 11 : i64} {
  func.func @qnet_kernel(%arg0: i32, %arg1: memref<16x8xf32, #tpu.memory_space<vmem>>, %arg2: memref<272x128xf32, #tpu.memory_space<vmem>>, %arg3: memref<16x2xf32, #tpu.memory_space<vmem>>) attributes {dimension_semantics = [#tpu.dimension_semantics<parallel>], iteration_bounds = array<i64: 1>, scalar_prefetch = 0 : i64, scratch_operands = 0 : i64, tpu.core_type = #tpu.core_type<tc>, window_params = [{transform_indices = @transform_0, window_bounds = array<i64: 16, 8>}, {pipeline_mode = #tpu.pipeline_mode<synchronous>, transform_indices = @transform_1, window_bounds = array<i64: 272, 128>}, {transform_indices = @transform_2, window_bounds = array<i64: 16, 2>}]} {
    %c0 = arith.constant 0 : index
    %c0_0 = arith.constant 0 : index
    %0 = vector.load %arg1[%c0, %c0_0] : memref<16x8xf32, #tpu.memory_space<vmem>>, vector<16x8xf32>
    %1 = arith.truncf %0 : vector<16x8xf32> to vector<16x8xbf16>
    %c0_1 = arith.constant 0 : index
    %c0_2 = arith.constant 0 : index
    %2 = vector.load %arg2[%c0_1, %c0_2] : memref<272x128xf32, #tpu.memory_space<vmem>>, vector<8x128xf32>
    %3 = arith.truncf %2 : vector<8x128xf32> to vector<8x128xbf16>
    %c8 = arith.constant 8 : index
    %c0_3 = arith.constant 0 : index
    %4 = vector.load %arg2[%c8, %c0_3] : memref<272x128xf32, #tpu.memory_space<vmem>>, vector<128x128xf32>
    %5 = arith.truncf %4 : vector<128x128xf32> to vector<128x128xbf16>
    %c136 = arith.constant 136 : index
    %c0_4 = arith.constant 0 : index
    %6 = vector.load %arg2[%c136, %c0_4] : memref<272x128xf32, #tpu.memory_space<vmem>>, vector<128x128xf32>
    %7 = arith.truncf %6 : vector<128x128xf32> to vector<128x128xbf16>
    %c264 = arith.constant 264 : index
    %c0_5 = arith.constant 0 : index
    %8 = vector.load %arg2[%c264, %c0_5] : memref<272x128xf32, #tpu.memory_space<vmem>>, vector<1x128xf32>
    %c265 = arith.constant 265 : index
    %c0_6 = arith.constant 0 : index
    %9 = vector.load %arg2[%c265, %c0_6] : memref<272x128xf32, #tpu.memory_space<vmem>>, vector<1x128xf32>
    %c266 = arith.constant 266 : index
    %c0_7 = arith.constant 0 : index
    %10 = vector.load %arg2[%c266, %c0_7] : memref<272x128xf32, #tpu.memory_space<vmem>>, vector<1x128xf32>
    %cst = arith.constant dense<0.000000e+00> : vector<16x128xf32>
    %11 = tpu.matmul %1, %3, %cst {dimension_numbers = #tpu.dot_dimension_numbers<[1], [0], [0], [1], [0, 0, 1, 1], [], []>} : vector<16x8xbf16>, vector<8x128xbf16>, vector<16x128xf32> -> vector<16x128xf32>
    %12 = vector.broadcast %8 : vector<1x128xf32> to vector<16x128xf32>
    %13 = arith.addf %11, %12 : vector<16x128xf32>
    %cst_8 = arith.constant 0.000000e+00 : f32
    %14 = vector.broadcast %cst_8 : f32 to vector<16x128xf32>
    %15 = arith.maximumf %13, %14 : vector<16x128xf32>
    %16 = arith.truncf %15 : vector<16x128xf32> to vector<16x128xbf16>
    %cst_9 = arith.constant dense<0.000000e+00> : vector<16x128xf32>
    %17 = tpu.matmul %16, %5, %cst_9 {dimension_numbers = #tpu.dot_dimension_numbers<[1], [0], [0], [1], [0, 0, 1, 1], [], []>} : vector<16x128xbf16>, vector<128x128xbf16>, vector<16x128xf32> -> vector<16x128xf32>
    %18 = vector.broadcast %9 : vector<1x128xf32> to vector<16x128xf32>
    %19 = arith.addf %17, %18 : vector<16x128xf32>
    %cst_10 = arith.constant 0.000000e+00 : f32
    %20 = vector.broadcast %cst_10 : f32 to vector<16x128xf32>
    %21 = arith.maximumf %19, %20 : vector<16x128xf32>
    %22 = arith.truncf %21 : vector<16x128xf32> to vector<16x128xbf16>
    %cst_11 = arith.constant dense<0.000000e+00> : vector<16x128xf32>
    %23 = tpu.matmul %22, %7, %cst_11 {dimension_numbers = #tpu.dot_dimension_numbers<[1], [0], [0], [1], [0, 0, 1, 1], [], []>} : vector<16x128xbf16>, vector<128x128xbf16>, vector<16x128xf32> -> vector<16x128xf32>
    %24 = vector.broadcast %10 : vector<1x128xf32> to vector<16x128xf32>
    %25 = arith.addf %23, %24 : vector<16x128xf32>
    %26 = vector.extract_strided_slice %25 {offsets = [0, 0], sizes = [16, 2], strides = [1, 1]} : vector<16x128xf32> to vector<16x2xf32>
    %c0_12 = arith.constant 0 : index
    %c0_13 = arith.constant 0 : index
    %27 = vector.load %arg3[%c0_12, %c0_13] : memref<16x2xf32, #tpu.memory_space<vmem>>, vector<16x2xf32>
    tpu.vector_store %arg3[%c0_12, %c0_13], %26 {strides = array<i32>} : memref<16x2xf32, #tpu.memory_space<vmem>>, vector<16x2xf32>,
    return
  }
  func.func @transform_0(%arg0: i32) -> (i32, i32) {
    %c0_i32 = arith.constant 0 : i32
    %c0_i32_0 = arith.constant 0 : i32
    return %arg0, %c0_i32 : i32, i32
  }
  func.func @transform_1(%arg0: i32) -> (i32, i32) {
    %c0_i32 = arith.constant 0 : i32
    %c0_i32_0 = arith.constant 0 : i32
    %c0_i32_1 = arith.constant 0 : i32
    return %c0_i32, %c0_i32_0 : i32, i32
  }
  func.func @transform_2(%arg0: i32) -> (i32, i32) {
    %c0_i32 = arith.constant 0 : i32
    %c0_i32_0 = arith.constant 0 : i32
    return %arg0, %c0_i32 : i32, i32
  }
}

</mosaic_0001>

<llo_original>
// kernel: tpu_custom_call.1
$region0: #{tpu_custom_call.1}
  #allocation0 [shape = 'u32[]', space=smem, size = 0x4, offset = 0x4, fixed_abs, tag = 'smem constant byte address 0x4 - core index']
  #allocation1 [shape = 'u32[72,128]{1,0:T(1,128)}', space=vmem, size = 0x9000, scoped, tag = 'internal scratch']
  %s0 = inlined_call_operand.vmem [shape: f32[16,8], index: 0, kind: input, shape index: {}]
  %s1 = inlined_call_operand.hbm [shape: f32[272,128], index: 1, kind: input, shape index: {}]
  %s2 = inlined_call_operand.vmem [shape: f32[16,2], index: 2, kind: output, shape index: {}]
  %s3 = sld [smem:[#allocation0]]
  $region22: #{tpu_custom_call.1} parent=0
    _
  %s5 = ssub.s32 1, %s3
  %s6 = scalar_select 0, %s5, %s3
  $region1: #{tpu_custom_call.1} parent=0
    #allocation2 [shape = 'u8[139264]{0}', space=vmem, size = 0x22000, scoped, tag = 'input window, operand 1, single buffered']
    #allocation3 [shape = 's32[1]{0}', space=sflag, size = 0x4, scoped, tag = 'scoped memory for tpu_custom_call.1']
    %7 = vsyncpa [#allocation3], 0
    // Predicated region
    $region2: #{tpu_custom_call.1} parent=1 // pred_check
      _
    $region3: #{tpu_custom_call.1} parent=1 // pred_check_branch
      %9 = sbr.rel (0) target = $region5
    $region4: #{tpu_custom_call.1} parent=1 // pred_region
      _
    $region5: #{tpu_custom_call.1} parent=1 // pred_fallthru
      _
    // Predicated region
    $region6: #{tpu_custom_call.1} parent=1 // pred_check
      _
    $region7: #{tpu_custom_call.1} parent=1 // pred_check_branch
      %11 = sbr.rel (0) target = $region9
    $region8: #{tpu_custom_call.1} parent=1 // pred_region
      %13 = vsyncadd [#allocation3], 0
      %s14 = sshll.u32 %s1, 4
      %s15 = int_to_ptr.hbm [resolvable:$true] %s14
      %s16 = sshll.u32 [#allocation2], 4
      %s17 = int_to_ptr.vmem [resolvable:$true] %s16
      %22 = dma.hbm_to_vmem [thread:$0]  %s15, 4352, %s17, [#allocation3], 128, 128, 8
    $region9: #{tpu_custom_call.1} parent=1 // pred_fallthru
      _
    // Predicated region
    $region10: #{tpu_custom_call.1} parent=1 // pred_check
      _
    $region11: #{tpu_custom_call.1} parent=1 // pred_check_branch
      %24 = sbr.rel (0) target = $region13
    $region12: #{tpu_custom_call.1} parent=1 // pred_region
      %26 = dma.done [#allocation3], 4352
    $region13: #{tpu_custom_call.1} parent=1 // pred_fallthru
      _
    %v28 = vld [vmem:[%s0] sm:$0xff]
    %v29 = vld [vmem:[%s0 + $0x8] sm:$0xff]
    %v30 = vpack.c.bf16 %v29, %v28
    %v31 = vld [vmem:[#allocation2] sm:$0xff]
    %v32 = vpack.c.bf16 %v31, %v31
    %v33 = vld [vmem:[#allocation2 + $0x8] sm:$0xff]
    %v34 = vld [vmem:[#allocation2 + $0x10] sm:$0xff]
    %v35 = vld [vmem:[#allocation2 + $0x18] sm:$0xff]
    %v36 = vld [vmem:[#allocation2 + $0x20] sm:$0xff]
    %v37 = vld [vmem:[#allocation2 + $0x28] sm:$0xff]
    %v38 = vld [vmem:[#allocation2 + $0x30] sm:$0xff]
    %v39 = vld [vmem:[#allocation2 + $0x38] sm:$0xff]
    %v40 = vld [vmem:[#allocation2 + $0x40] sm:$0xff]
    %v41 = vld [vmem:[#allocation2 + $0x48] sm:$0xff]
    %v42 = vld [vmem:[#allocation2 + $0x50] sm:$0xff]
    %v43 = vld [vmem:[#allocation2 + $0x58] sm:$0xff]
    %v44 = vld [vmem:[#allocation2 + $0x60] sm:$0xff]
    %v45 = vld [vmem:[#allocation2 + $0x68] sm:$0xff]
    %v46 = vld [vmem:[#allocation2 + $0x70] sm:$0xff]
    %v47 = vld [vmem:[#allocation2 + $0x78] sm:$0xff]
    %v48 = vld [vmem:[#allocation2 + $0x80] sm:$0xff]
    %v49 = vpack.c.bf16 %v34, %v33
    %v50 = vpack.c.bf16 %v36, %v35
    %v51 = vpack.c.bf16 %v38, %v37
    %v52 = vpack.c.bf16 %v40, %v39
    %v53 = vpack.c.bf16 %v42, %v41
    %v54 = vpack.c.bf16 %v44, %v43
    %v55 = vpack.c.bf16 %v46, %v45
    %v56 = vpack.c.bf16 %v48, %v47
    %v57 = vld [vmem:[#allocation2 + $0x88] sm:$0xff]
    %v58 = vld [vmem:[#allocation2 + $0x90] sm:$0xff]
    %v59 = vld [vmem:[#allocation2 + $0x98] sm:$0xff]
    %v60 = vld [vmem:[#allocation2 + $0xa0] sm:$0xff]
    %v61 = vld [vmem:[#allocation2 + $0xa8] sm:$0xff]
    %v62 = vld [vmem:[#allocation2 + $0xb0] sm:$0xff]
    %v63 = vld [vmem:[#allocation2 + $0xb8] sm:$0xff]
    %v64 = vld [vmem:[#allocation2 + $0xc0] sm:$0xff]
    %v65 = vld [vmem:[#allocation2 + $0xc8] sm:$0xff]
    %v66 = vld [vmem:[#allocation2 + $0xd0] sm:$0xff]
    %v67 = vld [vmem:[#allocation2 + $0xd8] sm:$0xff]
    %v68 = vld [vmem:[#allocation2 + $0xe0] sm:$0xff]
    %v69 = vld [vmem:[#allocation2 + $0xe8] sm:$0xff]
    %v70 = vld [vmem:[#allocation2 + $0xf0] sm:$0xff]
    %v71 = vld [vmem:[#allocation2 + $0xf8] sm:$0xff]
    %v72 = vld [vmem:[#allocation2 + $0x100] sm:$0xff]
    %v73 = vpack.c.bf16 %v58, %v57
    %v74 = vpack.c.bf16 %v60, %v59
    %v75 = vpack.c.bf16 %v62, %v61
    %v76 = vpack.c.bf16 %v64, %v63
    %v77 = vpack.c.bf16 %v66, %v65
    %v78 = vpack.c.bf16 %v68, %v67
    %v79 = vpack.c.bf16 %v70, %v69
    %v80 = vpack.c.bf16 %v72, %v71
    %v81 = vld [vmem:[#allocation2 + $0x108] sm:$0x1]
    %v82 = vld [vmem:[#allocation2 + $0x109] sm:$0x1]
    %v83 = vld [vmem:[#allocation2 + $0x10a] sm:$0x1]
    %v84 = vperm.slane %v81, 0
    %vm85 = vcmask 64512
    %v87 = vsel %vm85, %v30, 0
    %vm89 = vcmask 1043456
    %v91 = vsel %vm89, %v32, 0
    %93 = vmatpush.bf16.msra.mxu0 0
    %94 = vmatpush.bf16.msra.mxu0 0
    %95 = vmatpush.bf16.msra.mxu0 0
    %96 = vmatpush.bf16.msra.mxu0 0
    %97 = vmatpush.bf16.msra.mxu0 0
    %98 = vmatpush.bf16.msra.mxu0 0
    %99 = vmatpush.bf16.msra.mxu0 0
    %100 = vmatpush.bf16.msra.mxu0 %v91
    %101 = vmatmul.bf16.gmra.mxu0 %v87
    %v102 = vpop.f32.mrf.mxu0
    %v103 = vadd.f32 %v84, %v102
    %v104 = vpop.f32.mrf.mxu0
    %v105 = vadd.f32 %v84, %v104
    %106 = vdwg.mxu0
    %v107 = vmax.f32 %v103, 0.0
    %v108 = vmax.f32 %v105, 0.0
    %v109 = vpack.c.bf16 %v108, %v107
    %v110 = vperm.slane %v82, 0
    %111 = vmatpush.bf16.msra.mxu0 %v56
    %112 = vmatpush.bf16.msra.mxu0 %v55
    %113 = vmatpush.bf16.msra.mxu0 %v54
    %114 = vmatpush.bf16.msra.mxu0 %v53
    %115 = vmatpush.bf16.msra.mxu0 %v52
    %116 = vmatpush.bf16.msra.mxu0 %v51
    %117 = vmatpush.bf16.msra.mxu0 %v50
    %118 = vmatpush.bf16.msra.mxu0 %v49
    %119 = vmatmul.bf16.gmra.mxu0 %v109
    %v120 = vpop.f32.mrf.mxu0
    %v121 = vadd.f32 %v110, %v120
    %v122 = vpop.f32.mrf.mxu0
    %v123 = vadd.f32 %v110, %v122
    %124 = vdwg.mxu0
    %v125 = vmax.f32 %v121, 0.0
    %v126 = vmax.f32 %v123, 0.0
    %v127 = vpack.c.bf16 %v126, %v125
    %v128 = vperm.slane %v83, 0
    %129 = vmatpush.bf16.msra.mxu0 %v80
    %130 = vmatpush.bf16.msra.mxu0 %v79
    %131 = vmatpush.bf16.msra.mxu0 %v78
    %132 = vmatpush.bf16.msra.mxu0 %v77
    %133 = vmatpush.bf16.msra.mxu0 %v76
    %134 = vmatpush.bf16.msra.mxu0 %v75
    %135 = vmatpush.bf16.msra.mxu0 %v74
    %136 = vmatpush.bf16.msra.mxu0 %v73
    %137 = vmatmul.bf16.gmra.mxu0 %v127
    %v138 = vpop.f32.mrf.mxu0
    %v139 = vadd.f32 %v128, %v138
    %v140 = vpop.f32.mrf.mxu0
    %v141 = vadd.f32 %v128, %v140
    %142 = vdwg.mxu0
    %vm143 = vcmask 15360
    %144 = vst.msk [vmem:[%s2] sm:$0xff] %vm143, %v139
    %145 = vst.msk [vmem:[%s2 + $0x8] sm:$0xff] %vm143, %v141
    // Predicated region
    $region14: #{tpu_custom_call.1} parent=1 // pred_check
      _
    $region15: #{tpu_custom_call.1} parent=1 // pred_check_branch
      %147 = sbr.rel (0) target = $region17
    $region16: #{tpu_custom_call.1} parent=1 // pred_region
      _
    $region17: #{tpu_custom_call.1} parent=1 // pred_fallthru
      _
    // Predicated region
    $region18: #{tpu_custom_call.1} parent=1 // pred_check
      _
    $region19: #{tpu_custom_call.1} parent=1 // pred_check_branch
      %149 = sbr.rel (0) target = $region21
    $region20: #{tpu_custom_call.1} parent=1 // pred_region
      _
    $region21: #{tpu_custom_call.1} parent=1 // pred_fallthru
      _
    %150 = vsyncpa [#allocation3], 1

// kernel: tpu_custom_call.1
$region0: #{tpu_custom_call.1}
  #allocation0 [shape = 'u32[]', space=smem, size = 0x4, offset = 0x4, fixed_abs, tag = 'smem constant byte address 0x4 - core index']
  #allocation1 [shape = 'u32[72,128]{1,0:T(1,128)}', space=vmem, size = 0x9000, scoped, tag = 'internal scratch']
  %s0 = inlined_call_operand.vmem [shape: f32[16,8], index: 0, kind: input, shape index: {}]
  %s1 = inlined_call_operand.hbm [shape: f32[272,128], index: 1, kind: input, shape index: {}]
  %s2 = inlined_call_operand.vmem [shape: f32[16,2], index: 2, kind: output, shape index: {}]
  %s3 = sld [smem:[#allocation0]]
  $region22: #{tpu_custom_call.1} parent=0
    _
  %s5 = ssub.s32 1, %s3
  %s6 = scalar_select 0, %s5, %s3
  $region1: #{tpu_custom_call.1} parent=0
    #allocation2 [shape = 'u8[139264]{0}', space=vmem, size = 0x22000, scoped, tag = 'input window, operand 1, single buffered']
    #allocation3 [shape = 's32[1]{0}', space=sflag, size = 0x4, scoped, tag = 'scoped memory for tpu_custom_call.1']
    %7 = vsyncpa [#allocation3], 0
    // Predicated region
    $region2: #{tpu_custom_call.1} parent=1 // pred_check
      _
    $region3: #{tpu_custom_call.1} parent=1 // pred_check_branch
      %9 = sbr.rel (0) target = $region5
    $region4: #{tpu_custom_call.1} parent=1 // pred_region
      _
    $region5: #{tpu_custom_call.1} parent=1 // pred_fallthru
      _
    // Predicated region
    $region6: #{tpu_custom_call.1} parent=1 // pred_check
      _
    $region7: #{tpu_custom_call.1} parent=1 // pred_check_branch
      %11 = sbr.rel (0) target = $region9
    $region8: #{tpu_custom_call.1} parent=1 // pred_region
      %13 = vsyncadd [#allocation3], 0
      %s14 = sshll.u32 %s1, 4
      %s15 = int_to_ptr.hbm [resolvable:$true] %s14
      %s16 = sshll.u32 [#allocation2], 4
      %s17 = int_to_ptr.vmem [resolvable:$true] %s16
      %22 = dma.hbm_to_vmem [thread:$0]  %s15, 4352, %s17, [#allocation3], 128, 128, 8
    $region9: #{tpu_custom_call.1} parent=1 // pred_fallthru
      _
    // Predicated region
    $region10: #{tpu_custom_call.1} parent=1 // pred_check
      _
    $region11: #{tpu_custom_call.1} parent=1 // pred_check_branch
      %24 = sbr.rel (0) target = $region13
    $region12: #{tpu_custom_call.1} parent=1 // pred_region
      %26 = dma.done [#allocation3], 4352
    $region13: #{tpu_custom_call.1} parent=1 // pred_fallthru
      _
    %v28 = vld [vmem:[%s0] sm:$0xff]
    %v29 = vld [vmem:[%s0 + $0x8] sm:$0xff]
    %v30 = vpack.c.bf16 %v29, %v28
    %v31 = vld [vmem:[#allocation2] sm:$0xff]
    %v32 = vpack.c.bf16 %v31, %v31
    %v33 = vld [vmem:[#allocation2 + $0x8] sm:$0xff]
    %v34 = vld [vmem:[#allocation2 + $0x10] sm:$0xff]
    %v35 = vld [vmem:[#allocation2 + $0x18] sm:$0xff]
    %v36 = vld [vmem:[#allocation2 + $0x20] sm:$0xff]
    %v37 = vld [vmem:[#allocation2 + $0x28] sm:$0xff]
    %v38 = vld [vmem:[#allocation2 + $0x30] sm:$0xff]
    %v39 = vld [vmem:[#allocation2 + $0x38] sm:$0xff]
    %v40 = vld [vmem:[#allocation2 + $0x40] sm:$0xff]
    %v41 = vld [vmem:[#allocation2 + $0x48] sm:$0xff]
    %v42 = vld [vmem:[#allocation2 + $0x50] sm:$0xff]
    %v43 = vld [vmem:[#allocation2 + $0x58] sm:$0xff]
    %v44 = vld [vmem:[#allocation2 + $0x60] sm:$0xff]
    %v45 = vld [vmem:[#allocation2 + $0x68] sm:$0xff]
    %v46 = vld [vmem:[#allocation2 + $0x70] sm:$0xff]
    %v47 = vld [vmem:[#allocation2 + $0x78] sm:$0xff]
    %v48 = vld [vmem:[#allocation2 + $0x80] sm:$0xff]
    %v49 = vpack.c.bf16 %v34, %v33
    %v50 = vpack.c.bf16 %v36, %v35
    %v51 = vpack.c.bf16 %v38, %v37
    %v52 = vpack.c.bf16 %v40, %v39
    %v53 = vpack.c.bf16 %v42, %v41
    %v54 = vpack.c.bf16 %v44, %v43
    %v55 = vpack.c.bf16 %v46, %v45
    %v56 = vpack.c.bf16 %v48, %v47
    %v57 = vld [vmem:[#allocation2 + $0x88] sm:$0xff]
    %v58 = vld [vmem:[#allocation2 + $0x90] sm:$0xff]
    %v59 = vld [vmem:[#allocation2 + $0x98] sm:$0xff]
    %v60 = vld [vmem:[#allocation2 + $0xa0] sm:$0xff]
    %v61 = vld [vmem:[#allocation2 + $0xa8] sm:$0xff]
    %v62 = vld [vmem:[#allocation2 + $0xb0] sm:$0xff]
    %v63 = vld [vmem:[#allocation2 + $0xb8] sm:$0xff]
    %v64 = vld [vmem:[#allocation2 + $0xc0] sm:$0xff]
    %v65 = vld [vmem:[#allocation2 + $0xc8] sm:$0xff]
    %v66 = vld [vmem:[#allocation2 + $0xd0] sm:$0xff]
    %v67 = vld [vmem:[#allocation2 + $0xd8] sm:$0xff]
    %v68 = vld [vmem:[#allocation2 + $0xe0] sm:$0xff]
    %v69 = vld [vmem:[#allocation2 + $0xe8] sm:$0xff]
    %v70 = vld [vmem:[#allocation2 + $0xf0] sm:$0xff]
    %v71 = vld [vmem:[#allocation2 + $0xf8] sm:$0xff]
    %v72 = vld [vmem:[#allocation2 + $0x100] sm:$0xff]
    %v73 = vpack.c.bf16 %v58, %v57
    %v74 = vpack.c.bf16 %v60, %v59
    %v75 = vpack.c.bf16 %v62, %v61
    %v76 = vpack.c.bf16 %v64, %v63
    %v77 = vpack.c.bf16 %v66, %v65
    %v78 = vpack.c.bf16 %v68, %v67
    %v79 = vpack.c.bf16 %v70, %v69
    %v80 = vpack.c.bf16 %v72, %v71
    %v81 = vld [vmem:[#allocation2 + $0x108] sm:$0x1]
    %v82 = vld [vmem:[#allocation2 + $0x109] sm:$0x1]
    %v83 = vld [vmem:[#allocation2 + $0x10a] sm:$0x1]
    %v84 = vperm.slane %v81, 0
    %vm85 = vcmask 64512
    %v87 = vsel %vm85, %v30, 0
    %vm89 = vcmask 1043456
    %v91 = vsel %vm89, %v32, 0
    %93 = vmatpush.bf16.msra.mxu0 0
    %94 = vmatpush.bf16.msra.mxu0 0
    %95 = vmatpush.bf16.msra.mxu0 0
    %96 = vmatpush.bf16.msra.mxu0 0
    %97 = vmatpush.bf16.msra.mxu0 0
    %98 = vmatpush.bf16.msra.mxu0 0
    %99 = vmatpush.bf16.msra.mxu0 0
    %100 = vmatpush.bf16.msra.mxu0 %v91
    %101 = vmatmul.bf16.gmra.mxu0 %v87
    %v102 = vpop.f32.mrf.mxu0
    %v103 = vadd.f32 %v84, %v102
    %v104 = vpop.f32.mrf.mxu0
    %v105 = vadd.f32 %v84, %v104
    %106 = vdwg.mxu0
    %v107 = vmax.f32 %v103, 0.0
    %v108 = vmax.f32 %v105, 0.0
    %v109 = vpack.c.bf16 %v108, %v107
    %v110 = vperm.slane %v82, 0
    %111 = vmatpush.bf16.msra.mxu0 %v56
    %112 = vmatpush.bf16.msra.mxu0 %v55
    %113 = vmatpush.bf16.msra.mxu0 %v54
    %114 = vmatpush.bf16.msra.mxu0 %v53
    %115 = vmatpush.bf16.msra.mxu0 %v52
    %116 = vmatpush.bf16.msra.mxu0 %v51
    %117 = vmatpush.bf16.msra.mxu0 %v50
    %118 = vmatpush.bf16.msra.mxu0 %v49
    %119 = vmatmul.bf16.gmra.mxu0 %v109
    %v120 = vpop.f32.mrf.mxu0
    %v121 = vadd.f32 %v110, %v120
    %v122 = vpop.f32.mrf.mxu0
    %v123 = vadd.f32 %v110, %v122
    %124 = vdwg.mxu0
    %v125 = vmax.f32 %v121, 0.0
    %v126 = vmax.f32 %v123, 0.0
    %v127 = vpack.c.bf16 %v126, %v125
    %v128 = vperm.slane %v83, 0
    %129 = vmatpush.bf16.msra.mxu0 %v80
    %130 = vmatpush.bf16.msra.mxu0 %v79
    %131 = vmatpush.bf16.msra.mxu0 %v78
    %132 = vmatpush.bf16.msra.mxu0 %v77
    %133 = vmatpush.bf16.msra.mxu0 %v76
    %134 = vmatpush.bf16.msra.mxu0 %v75
    %135 = vmatpush.bf16.msra.mxu0 %v74
    %136 = vmatpush.bf16.msra.mxu0 %v73
    %137 = vmatmul.bf16.gmra.mxu0 %v127
    %v138 = vpop.f32.mrf.mxu0
    %v139 = vadd.f32 %v128, %v138
    %v140 = vpop.f32.mrf.mxu0
    %v141 = vadd.f32 %v128, %v140
    %142 = vdwg.mxu0
    %vm143 = vcmask 15360
    %144 = vst.msk [vmem:[%s2] sm:$0xff] %vm143, %v139
    %145 = vst.msk [vmem:[%s2 + $0x8] sm:$0xff] %vm143, %v141
    // Predicated region
    $region14: #{tpu_custom_call.1} parent=1 // pred_check
      _
    $region15: #{tpu_custom_call.1} parent=1 // pred_check_branch
      %147 = sbr.rel (0) target = $region17
    $region16: #{tpu_custom_call.1} parent=1 // pred_region
      _
    $region17: #{tpu_custom_call.1} parent=1 // pred_fallthru
      _
    // Predicated region
    $region18: #{tpu_custom_call.1} parent=1 // pred_check
      _
    $region19: #{tpu_custom_call.1} parent=1 // pred_check_branch
      %149 = sbr.rel (0) target = $region21
    $region20: #{tpu_custom_call.1} parent=1 // pred_region
      _
    $region21: #{tpu_custom_call.1} parent=1 // pred_fallthru
      _
    %150 = vsyncpa [#allocation3], 1

</llo_original>
